<compile_context>
chip_gen: v5e
topology: v5e:2x2
jax: 0.10.0
libtpu: 0.0.40
codegen_flags: <defaults>
</compile_context>

<pallas_src>
import jax
import jax.numpy as jnp
from jax.experimental import pallas as pl
from jax.experimental.pallas import tpu as pltpu


def part_f_kernel(slab_ref, w_ref, gamma_ref, beta_ref, out_ref):
    # slab_ref  : (T, L)      im2col rows, T = C_in*9, L = N*H*W
    # w_ref     : (C_out, T)  folded conv weights (1x1 composed into 3x3)
    # gamma/beta: (C_out, 1)  BN affine params
    # out_ref   : (C_out, L)  lane-dense output slab
    T, L = slab_ref.shape
    eps = 1e-5

    slab = slab_ref[...].astype(jnp.float32)          # (T, L)
    w = w_ref[...].astype(jnp.float32)                # (C_out, T)

    # Fused conv: acc[o, l] = sum_t w[o, t] * slab[t, l]
    acc = w[:, 0:1] * slab[0:1, :]                    # seed with first tap
    for t in range(1, T):
        acc = acc + w[:, t:t + 1] * slab[t:t + 1, :]

    # BatchNorm (training mode, biased variance) -- one-pass statistics.
    inv_count = 1.0 / float(L)
    s1 = jnp.sum(acc, axis=-1, keepdims=True)         # (C_out, 1)
    s2 = jnp.sum(acc * acc, axis=-1, keepdims=True)   # (C_out, 1)
    mean = s1 * inv_count
    var = s2 * inv_count - mean * mean
    scale = jax.lax.rsqrt(var + eps) * gamma_ref[...]     # (C_out, 1)
    shift = beta_ref[...] - mean * scale                  # (C_out, 1)

    # Single wide, unmasked store of the whole (C_out, L) slab.
    out_ref[...] = (acc * scale + shift).astype(out_ref.dtype)


def part_f_forward(x, w1, w2, gamma, beta):
    """x: [N, C_in, H, W]; w1: [1, C_in, 1, 1]; w2: [C_out, 1, 3, 3];
    gamma/beta: [C_out]. Returns [N, C_out, H, W]."""
    N, C_in, H, W = x.shape
    C_out = w2.shape[0]
    L = N * H * W
    T = C_in * 9

    # Fold the 1x1 conv into the 3x3 conv weights.
    w1c = w1.reshape(C_in).astype(jnp.float32)                   # (C_in,)
    w2f = w2.reshape(C_out, 9).astype(jnp.float32)               # (C_out, 9)
    w_eff = w1c[:, None, None] * w2f[None, :, :]                 # (C_in, C_out, 9)
    w_eff = jnp.transpose(w_eff, (1, 0, 2)).reshape(C_out, T)    # (C_out, C_in*9)

    # Pre-pad and im2col in the wrapper (lane-dense working layout).
    x_pad = jnp.pad(x.astype(jnp.float32), ((0, 0), (0, 0), (1, 1), (1, 1)))
    rows = []
    for c in range(C_in):
        for ky in range(3):
            for kx in range(3):
                rows.append(x_pad[:, c, ky:ky + H, kx:kx + W].reshape(L))
    slab = jnp.stack(rows, axis=0)                               # (T, L)

    out_slab = pl.pallas_call(
        part_f_kernel,
        out_shape=jax.ShapeDtypeStruct((C_out, L), x.dtype),
        in_specs=[
            pl.BlockSpec(memory_space=pltpu.MemorySpace.VMEM),   # slab
            pl.BlockSpec(memory_space=pltpu.MemorySpace.VMEM),   # w_eff
            pl.BlockSpec(memory_space=pltpu.MemorySpace.VMEM),   # gamma
            pl.BlockSpec(memory_space=pltpu.MemorySpace.VMEM),   # beta
        ],
        out_specs=pl.BlockSpec(memory_space=pltpu.MemorySpace.VMEM),
    )(slab, w_eff,
      gamma.reshape(C_out, 1).astype(jnp.float32),
      beta.reshape(C_out, 1).astype(jnp.float32))

    # (C_out, N*H*W) -> (N, C_out, H, W)
    return jnp.transpose(out_slab.reshape(C_out, N, H, W), (1, 0, 2, 3))


def part_f_reference(x, w1, w2, gamma, beta, eps=1e-5):
    """Pure-JAX reference mirroring the PyTorch forward (training-mode BN)."""
    dn = ("NCHW", "OIHW", "NCHW")
    y = jax.lax.conv_general_dilated(x, w1, (1, 1), "VALID", dimension_numbers=dn)
    z = jax.lax.conv_general_dilated(y, w2, (1, 1), ((1, 1), (1, 1)),
                                     dimension_numbers=dn)
    mean = z.mean(axis=(0, 2, 3), keepdims=True)
    var = z.var(axis=(0, 2, 3), keepdims=True)          # biased, like PyTorch BN fwd
    g = gamma.reshape(1, -1, 1, 1)
    b = beta.reshape(1, -1, 1, 1)
    return (z - mean) / jnp.sqrt(var + eps) * g + b


if __name__ == "__main__":
    key = jax.random.PRNGKey(0)
    k_x, k_w1, k_w2 = jax.random.split(key, 3)

    N, C_in, H, W = 2, 1, 16, 16      # module default: input_channel=1
    C_out = 8

    x = jax.random.normal(k_x, (N, C_in, H, W), dtype=jnp.float32)
    # Deterministic synthetic weights (shapes match nn.Conv2d in __init__)
    w1 = jax.random.uniform(k_w1, (1, C_in, 1, 1), jnp.float32, -1.0, 1.0)
    w2 = jax.random.uniform(k_w2, (C_out, 1, 3, 3), jnp.float32, -1.0 / 3, 1.0 / 3)
    gamma = jnp.ones((C_out,), jnp.float32)   # BatchNorm2d default init
    beta = jnp.zeros((C_out,), jnp.float32)

    out = part_f_forward(x, w1, w2, gamma, beta)
    out = jax.block_until_ready(out)

    ref = part_f_reference(x, w1, w2, gamma, beta)
    assert out.shape == (N, C_out, H, W)
    assert jnp.allclose(out, ref, atol=2e-3, rtol=2e-3), (
        f"max abs err {jnp.max(jnp.abs(out - ref))}")

    print("KERNEL_OK")
</pallas_src>

<mosaic_0001>
module attributes {stable_mosaic.version = 11 : i64} {
  func.func @part_f_kernel(%arg0: memref<9x512xf32, #tpu.memory_space<vmem>>, %arg1: memref<8x9xf32, #tpu.memory_space<vmem>>, %arg2: memref<8x1xf32, #tpu.memory_space<vmem>>, %arg3: memref<8x1xf32, #tpu.memory_space<vmem>>, %arg4: memref<8x512xf32, #tpu.memory_space<vmem>>) attributes {dimension_semantics = [], scalar_prefetch = 0 : i64, scratch_operands = 0 : i64, tpu.core_type = #tpu.core_type<tc>} {
    %c0 = arith.constant 0 : index
    %c0_0 = arith.constant 0 : index
    %0 = vector.load %arg0[%c0, %c0_0] : memref<9x512xf32, #tpu.memory_space<vmem>>, vector<9x512xf32>
    %c0_1 = arith.constant 0 : index
    %c0_2 = arith.constant 0 : index
    %1 = vector.load %arg1[%c0_1, %c0_2] : memref<8x9xf32, #tpu.memory_space<vmem>>, vector<8x9xf32>
    %2 = vector.extract_strided_slice %1 {offsets = [0, 0], sizes = [8, 1], strides = [1, 1]} : vector<8x9xf32> to vector<8x1xf32>
    %3 = vector.extract_strided_slice %0 {offsets = [0, 0], sizes = [1, 512], strides = [1, 1]} : vector<9x512xf32> to vector<1x512xf32>
    %4 = vector.broadcast %2 : vector<8x1xf32> to vector<8x512xf32>
    %5 = vector.broadcast %3 : vector<1x512xf32> to vector<8x512xf32>
    %6 = arith.mulf %4, %5 : vector<8x512xf32>
    %7 = vector.extract_strided_slice %1 {offsets = [0, 1], sizes = [8, 1], strides = [1, 1]} : vector<8x9xf32> to vector<8x1xf32>
    %8 = vector.extract_strided_slice %0 {offsets = [1, 0], sizes = [1, 512], strides = [1, 1]} : vector<9x512xf32> to vector<1x512xf32>
    %9 = vector.broadcast %7 : vector<8x1xf32> to vector<8x512xf32>
    %10 = vector.broadcast %8 : vector<1x512xf32> to vector<8x512xf32>
    %11 = arith.mulf %9, %10 : vector<8x512xf32>
    %12 = arith.addf %6, %11 : vector<8x512xf32>
    %13 = vector.extract_strided_slice %1 {offsets = [0, 2], sizes = [8, 1], strides = [1, 1]} : vector<8x9xf32> to vector<8x1xf32>
    %14 = vector.extract_strided_slice %0 {offsets = [2, 0], sizes = [1, 512], strides = [1, 1]} : vector<9x512xf32> to vector<1x512xf32>
    %15 = vector.broadcast %13 : vector<8x1xf32> to vector<8x512xf32>
    %16 = vector.broadcast %14 : vector<1x512xf32> to vector<8x512xf32>
    %17 = arith.mulf %15, %16 : vector<8x512xf32>
    %18 = arith.addf %12, %17 : vector<8x512xf32>
    %19 = vector.extract_strided_slice %1 {offsets = [0, 3], sizes = [8, 1], strides = [1, 1]} : vector<8x9xf32> to vector<8x1xf32>
    %20 = vector.extract_strided_slice %0 {offsets = [3, 0], sizes = [1, 512], strides = [1, 1]} : vector<9x512xf32> to vector<1x512xf32>
    %21 = vector.broadcast %19 : vector<8x1xf32> to vector<8x512xf32>
    %22 = vector.broadcast %20 : vector<1x512xf32> to vector<8x512xf32>
    %23 = arith.mulf %21, %22 : vector<8x512xf32>
    %24 = arith.addf %18, %23 : vector<8x512xf32>
    %25 = vector.extract_strided_slice %1 {offsets = [0, 4], sizes = [8, 1], strides = [1, 1]} : vector<8x9xf32> to vector<8x1xf32>
    %26 = vector.extract_strided_slice %0 {offsets = [4, 0], sizes = [1, 512], strides = [1, 1]} : vector<9x512xf32> to vector<1x512xf32>
    %27 = vector.broadcast %25 : vector<8x1xf32> to vector<8x512xf32>
    %28 = vector.broadcast %26 : vector<1x512xf32> to vector<8x512xf32>
    %29 = arith.mulf %27, %28 : vector<8x512xf32>
    %30 = arith.addf %24, %29 : vector<8x512xf32>
    %31 = vector.extract_strided_slice %1 {offsets = [0, 5], sizes = [8, 1], strides = [1, 1]} : vector<8x9xf32> to vector<8x1xf32>
    %32 = vector.extract_strided_slice %0 {offsets = [5, 0], sizes = [1, 512], strides = [1, 1]} : vector<9x512xf32> to vector<1x512xf32>
    %33 = vector.broadcast %31 : vector<8x1xf32> to vector<8x512xf32>
    %34 = vector.broadcast %32 : vector<1x512xf32> to vector<8x512xf32>
    %35 = arith.mulf %33, %34 : vector<8x512xf32>
    %36 = arith.addf %30, %35 : vector<8x512xf32>
    %37 = vector.extract_strided_slice %1 {offsets = [0, 6], sizes = [8, 1], strides = [1, 1]} : vector<8x9xf32> to vector<8x1xf32>
    %38 = vector.extract_strided_slice %0 {offsets = [6, 0], sizes = [1, 512], strides = [1, 1]} : vector<9x512xf32> to vector<1x512xf32>
    %39 = vector.broadcast %37 : vector<8x1xf32> to vector<8x512xf32>
    %40 = vector.broadcast %38 : vector<1x512xf32> to vector<8x512xf32>
    %41 = arith.mulf %39, %40 : vector<8x512xf32>
    %42 = arith.addf %36, %41 : vector<8x512xf32>
    %43 = vector.extract_strided_slice %1 {offsets = [0, 7], sizes = [8, 1], strides = [1, 1]} : vector<8x9xf32> to vector<8x1xf32>
    %44 = vector.extract_strided_slice %0 {offsets = [7, 0], sizes = [1, 512], strides = [1, 1]} : vector<9x512xf32> to vector<1x512xf32>
    %45 = vector.broadcast %43 : vector<8x1xf32> to vector<8x512xf32>
    %46 = vector.broadcast %44 : vector<1x512xf32> to vector<8x512xf32>
    %47 = arith.mulf %45, %46 : vector<8x512xf32>
    %48 = arith.addf %42, %47 : vector<8x512xf32>
    %49 = vector.extract_strided_slice %1 {offsets = [0, 8], sizes = [8, 1], strides = [1, 1]} : vector<8x9xf32> to vector<8x1xf32>
    %50 = vector.extract_strided_slice %0 {offsets = [8, 0], sizes = [1, 512], strides = [1, 1]} : vector<9x512xf32> to vector<1x512xf32>
    %51 = vector.broadcast %49 : vector<8x1xf32> to vector<8x512xf32>
    %52 = vector.broadcast %50 : vector<1x512xf32> to vector<8x512xf32>
    %53 = arith.mulf %51, %52 : vector<8x512xf32>
    %54 = arith.addf %48, %53 : vector<8x512xf32>
    %cst = arith.constant dense<0.000000e+00> : vector<8xf32>
    %55 = vector.multi_reduction <add>, %54, %cst [1] : vector<8x512xf32> to vector<8xf32>
    %56 = vector.shape_cast %55 : vector<8xf32> to vector<8x1xf32>
    %57 = arith.mulf %54, %54 : vector<8x512xf32>
    %cst_3 = arith.constant dense<0.000000e+00> : vector<8xf32>
    %58 = vector.multi_reduction <add>, %57, %cst_3 [1] : vector<8x512xf32> to vector<8xf32>
    %59 = vector.shape_cast %58 : vector<8xf32> to vector<8x1xf32>
    %cst_4 = arith.constant 0.001953125 : f32
    %60 = vector.broadcast %cst_4 : f32 to vector<8x1xf32>
    %61 = arith.mulf %56, %60 : vector<8x1xf32>
    %cst_5 = arith.constant 0.001953125 : f32
    %62 = vector.broadcast %cst_5 : f32 to vector<8x1xf32>
    %63 = arith.mulf %59, %62 : vector<8x1xf32>
    %64 = arith.mulf %61, %61 : vector<8x1xf32>
    %65 = arith.subf %63, %64 : vector<8x1xf32>
    %cst_6 = arith.constant 9.99999974E-6 : f32
    %66 = vector.broadcast %cst_6 : f32 to vector<8x1xf32>
    %67 = arith.addf %65, %66 : vector<8x1xf32>
    %68 = math.rsqrt %67 : vector<8x1xf32>
    %c0_7 = arith.constant 0 : index
    %c0_8 = arith.constant 0 : index
    %69 = vector.load %arg2[%c0_7, %c0_8] : memref<8x1xf32, #tpu.memory_space<vmem>>, vector<8x1xf32>
    %70 = arith.mulf %68, %69 : vector<8x1xf32>
    %c0_9 = arith.constant 0 : index
    %c0_10 = arith.constant 0 : index
    %71 = vector.load %arg3[%c0_9, %c0_10] : memref<8x1xf32, #tpu.memory_space<vmem>>, vector<8x1xf32>
    %72 = arith.mulf %61, %70 : vector<8x1xf32>
    %73 = arith.subf %71, %72 : vector<8x1xf32>
    %74 = vector.broadcast %70 : vector<8x1xf32> to vector<8x512xf32>
    %75 = arith.mulf %54, %74 : vector<8x512xf32>
    %76 = vector.broadcast %73 : vector<8x1xf32> to vector<8x512xf32>
    %77 = arith.addf %75, %76 : vector<8x512xf32>
    %c0_11 = arith.constant 0 : index
    %c0_12 = arith.constant 0 : index
    %78 = vector.load %arg4[%c0_11, %c0_12] : memref<8x512xf32, #tpu.memory_space<vmem>>, vector<8x512xf32>
    tpu.vector_store %arg4[%c0_11, %c0_12], %77 {strides = array<i32>} : memref<8x512xf32, #tpu.memory_space<vmem>>, vector<8x512xf32>,
    return
  }
}

</mosaic_0001>

<llo_original>
// kernel: tpu_custom_call.1
$region0: #{tpu_custom_call.1}
  #allocation0 [shape = 'u32[]', space=smem, size = 0x4, offset = 0x4, fixed_abs, tag = 'smem constant byte address 0x4 - core index']
  #allocation1 [shape = 'u32[72,128]{1,0:T(1,128)}', space=vmem, size = 0x9000, scoped, tag = 'internal scratch']
  %s0 = inlined_call_operand.hbm [shape: f32[9,512], index: 0, kind: input, shape index: {}]
  %s1 = inlined_call_operand.vmem [shape: f32[8,9], index: 1, kind: input, shape index: {}]
  %s2 = inlined_call_operand.vmem [shape: f32[8,1], index: 2, kind: input, shape index: {}]
  %s3 = inlined_call_operand.vmem [shape: f32[8,1], index: 3, kind: input, shape index: {}]
  %s4 = inlined_call_operand.hbm [shape: f32[8,512], index: 4, kind: output, shape index: {}]
  %s5 = sld [smem:[#allocation0]]
  $region30: #{tpu_custom_call.1} parent=0
    _
  %s7 = ssub.s32 1, %s5
  %s8 = scalar_select 0, %s7, %s5
  $region1: #{tpu_custom_call.1} parent=0
    #allocation2 [shape = 'u8[32768]{0}', space=vmem, size = 0x8000, scoped, tag = 'input window, operand 0, single buffered']
    #allocation3 [shape = 's32[1]{0}', space=sflag, size = 0x4, scoped, tag = 'scoped memory for tpu_custom_call.1']
    #allocation4 [shape = 's32[1]{0}', space=sflag, size = 0x4, scoped, tag = 'scoped memory for tpu_custom_call.1']
    #allocation5 [shape = 'u8[16384]{0}', space=vmem, size = 0x4000, scoped, tag = 'output window, operand 0, single buffered']
    %9 = vsyncpa [#allocation3], 0
    %10 = vsyncpa [#allocation4], 0
    // Predicated region
    $region2: #{tpu_custom_call.1} parent=1 // pred_check
      _
    $region3: #{tpu_custom_call.1} parent=1 // pred_check_branch
      %12 = sbr.rel (0) target = $region5
    $region4: #{tpu_custom_call.1} parent=1 // pred_region
      %14 = vsyncadd [#allocation3], 0
      %s15 = sshll.u32 %s0, 4
      %s16 = int_to_ptr.hbm [resolvable:$true] %s15
      %s17 = sshll.u32 [#allocation2], 4
      %s18 = int_to_ptr.vmem [resolvable:$true] %s17
      %23 = dma.hbm_to_vmem [thread:$0]  %s16, 1024, %s18, [#allocation3], 512, 512, 32
    $region5: #{tpu_custom_call.1} parent=1 // pred_fallthru
      _
    // Predicated region
    $region6: #{tpu_custom_call.1} parent=1 // pred_check
      _
    $region7: #{tpu_custom_call.1} parent=1 // pred_check_branch
      %25 = sbr.rel (0) target = $region9
    $region8: #{tpu_custom_call.1} parent=1 // pred_region
      _
    $region9: #{tpu_custom_call.1} parent=1 // pred_fallthru
      _
    // Predicated region
    $region10: #{tpu_custom_call.1} parent=1 // pred_check
      _
    $region11: #{tpu_custom_call.1} parent=1 // pred_check_branch
      %27 = sbr.rel (0) target = $region13
    $region12: #{tpu_custom_call.1} parent=1 // pred_region
      _
    $region13: #{tpu_custom_call.1} parent=1 // pred_fallthru
      _
    // Predicated region
    $region14: #{tpu_custom_call.1} parent=1 // pred_check
      _
    $region15: #{tpu_custom_call.1} parent=1 // pred_check_branch
      %29 = sbr.rel (0) target = $region17
    $region16: #{tpu_custom_call.1} parent=1 // pred_region
      _
    $region17: #{tpu_custom_call.1} parent=1 // pred_fallthru
      _
    // Predicated region
    $region18: #{tpu_custom_call.1} parent=1 // pred_check
      _
    $region19: #{tpu_custom_call.1} parent=1 // pred_check_branch
      %31 = sbr.rel (0) target = $region21
    $region20: #{tpu_custom_call.1} parent=1 // pred_region
      %33 = dma.done [#allocation3], 1024
    $region21: #{tpu_custom_call.1} parent=1 // pred_fallthru
      _
    %v34 = vld [vmem:[#allocation2] sm:$0xff]
    %v35 = vld [vmem:[#allocation2 + $0x8] sm:$0xff]
    %v36 = vld [vmem:[#allocation2 + $0x10] sm:$0xff]
    %v37 = vld [vmem:[#allocation2 + $0x18] sm:$0xff]
    %v38 = vld [vmem:[#allocation2 + $0x20] sm:$0x1]
    %v39 = vld [vmem:[#allocation2 + $0x28] sm:$0x1]
    %v40 = vld [vmem:[#allocation2 + $0x30] sm:$0x1]
    %v41 = vld [vmem:[#allocation2 + $0x38] sm:$0x1]
    %v42 = vld [vmem:[%s1] sm:$0xff]
    %44 = vset.pattern.permute.xlu0 0
    %45 = vperm.xlu0 %44, %v42
    %v46 = vpop.permute.xlu0 %45
    %v48 = vperm.slane %v34, 0
    %v49 = vperm.slane %v35, 0
    %v50 = vperm.slane %v36, 0
    %v51 = vperm.slane %v37, 0
    %v52 = vmul.f32 %v46, %v48
    %v53 = vmul.f32 %v46, %v49
    %v54 = vmul.f32 %v46, %v50
    %v55 = vmul.f32 %v46, %v51
    %56 = vset.pattern.permute.xlu0 1
    %57 = vperm.xlu0 %56, %v42
    %v58 = vpop.permute.xlu0 %57
    %v60 = vperm.slane %v34, 1
    %v61 = vperm.slane %v35, 1
    %v62 = vperm.slane %v36, 1
    %v63 = vperm.slane %v37, 1
    %v64 = vmul.f32 %v58, %v60
    %v65 = vmul.f32 %v58, %v61
    %v66 = vmul.f32 %v58, %v62
    %v67 = vmul.f32 %v58, %v63
    %v68 = vadd.f32 %v52, %v64
    %v69 = vadd.f32 %v53, %v65
    %v70 = vadd.f32 %v54, %v66
    %v71 = vadd.f32 %v55, %v67
    %72 = vset.pattern.permute.xlu0 2
    %73 = vperm.xlu0 %72, %v42
    %v74 = vpop.permute.xlu0 %73
    %v76 = vperm.slane %v34, 2
    %v77 = vperm.slane %v35, 2
    %v78 = vperm.slane %v36, 2
    %v79 = vperm.slane %v37, 2
    %v80 = vmul.f32 %v74, %v76
    %v81 = vmul.f32 %v74, %v77
    %v82 = vmul.f32 %v74, %v78
    %v83 = vmul.f32 %v74, %v79
    %v84 = vadd.f32 %v68, %v80
    %v85 = vadd.f32 %v69, %v81
    %v86 = vadd.f32 %v70, %v82
    %v87 = vadd.f32 %v71, %v83
    %88 = vset.pattern.permute.xlu0 3
    %89 = vperm.xlu0 %88, %v42
    %v90 = vpop.permute.xlu0 %89
    %v92 = vperm.slane %v34, 3
    %v93 = vperm.slane %v35, 3
    %v94 = vperm.slane %v36, 3
    %v95 = vperm.slane %v37, 3
    %v96 = vmul.f32 %v90, %v92
    %v97 = vmul.f32 %v90, %v93
    %v98 = vmul.f32 %v90, %v94
    %v99 = vmul.f32 %v90, %v95
    %v100 = vadd.f32 %v84, %v96
    %v101 = vadd.f32 %v85, %v97
    %v102 = vadd.f32 %v86, %v98
    %v103 = vadd.f32 %v87, %v99
    %104 = vset.pattern.permute.xlu0 4
    %105 = vperm.xlu0 %104, %v42
    %v106 = vpop.permute.xlu0 %105
    %v108 = vperm.slane %v34, 4
    %v109 = vperm.slane %v35, 4
    %v110 = vperm.slane %v36, 4
    %v111 = vperm.slane %v37, 4
    %v112 = vmul.f32 %v106, %v108
    %v113 = vmul.f32 %v106, %v109
    %v114 = vmul.f32 %v106, %v110
    %v115 = vmul.f32 %v106, %v111
    %v116 = vadd.f32 %v100, %v112
    %v117 = vadd.f32 %v101, %v113
    %v118 = vadd.f32 %v102, %v114
    %v119 = vadd.f32 %v103, %v115
    %120 = vset.pattern.permute.xlu0 5
    %121 = vperm.xlu0 %120, %v42
    %v122 = vpop.permute.xlu0 %121
    %v124 = vperm.slane %v34, 5
    %v125 = vperm.slane %v35, 5
    %v126 = vperm.slane %v36, 5
    %v127 = vperm.slane %v37, 5
    %v128 = vmul.f32 %v122, %v124
    %v129 = vmul.f32 %v122, %v125
    %v130 = vmul.f32 %v122, %v126
    %v131 = vmul.f32 %v122, %v127
    %v132 = vadd.f32 %v116, %v128
    %v133 = vadd.f32 %v117, %v129
    %v134 = vadd.f32 %v118, %v130
    %v135 = vadd.f32 %v119, %v131
    %136 = vset.pattern.permute.xlu0 6
    %137 = vperm.xlu0 %136, %v42
    %v138 = vpop.permute.xlu0 %137
    %v140 = vperm.slane %v34, 6
    %v141 = vperm.slane %v35, 6
    %v142 = vperm.slane %v36, 6
    %v143 = vperm.slane %v37, 6
    %v144 = vmul.f32 %v138, %v140
    %v145 = vmul.f32 %v138, %v141
    %v146 = vmul.f32 %v138, %v142
    %v147 = vmul.f32 %v138, %v143
    %v148 = vadd.f32 %v132, %v144
    %v149 = vadd.f32 %v133, %v145
    %v150 = vadd.f32 %v134, %v146
    %v151 = vadd.f32 %v135, %v147
    %152 = vset.pattern.permute.xlu0 7
    %153 = vperm.xlu0 %152, %v42
    %v154 = vpop.permute.xlu0 %153
    %v156 = vperm.slane %v34, 7
    %v157 = vperm.slane %v35, 7
    %v158 = vperm.slane %v36, 7
    %v159 = vperm.slane %v37, 7
    %v160 = vmul.f32 %v154, %v156
    %v161 = vmul.f32 %v154, %v157
    %v162 = vmul.f32 %v154, %v158
    %v163 = vmul.f32 %v154, %v159
    %v164 = vadd.f32 %v148, %v160
    %v165 = vadd.f32 %v149, %v161
    %v166 = vadd.f32 %v150, %v162
    %v167 = vadd.f32 %v151, %v163
    %168 = vset.pattern.permute.xlu0 8
    %169 = vperm.xlu0 %168, %v42
    %v170 = vpop.permute.xlu0 %169
    %v172 = vperm.slane %v38, 0
    %v173 = vperm.slane %v39, 0
    %v174 = vperm.slane %v40, 0
    %v175 = vperm.slane %v41, 0
    %v176 = vmul.f32 %v170, %v172
    %v177 = vmul.f32 %v170, %v173
    %v178 = vmul.f32 %v170, %v174
    %v179 = vmul.f32 %v170, %v175
    %v180 = vadd.f32 %v164, %v176
    %v181 = vadd.f32 %v165, %v177
    %v182 = vadd.f32 %v166, %v178
    %v183 = vadd.f32 %v167, %v179
    %v184 = vadd.f32 %v180, %v181
    %v185 = vadd.f32 %v184, %v182
    %v186 = vadd.f32 %v185, %v183
    %187 = vadd.xlane.f32.xlu0 %v186
    %v188 = vpop.xlane.xlu0 %187
    %v189 = vmul.f32 %v180, %v180
    %v190 = vmul.f32 %v181, %v181
    %v191 = vmul.f32 %v182, %v182
    %v192 = vmul.f32 %v183, %v183
    %v193 = vadd.f32 %v189, %v190
    %v194 = vadd.f32 %v193, %v191
    %v195 = vadd.f32 %v194, %v192
    %196 = vadd.xlane.f32.xlu0 %v195
    %v197 = vpop.xlane.xlu0 %196
    %v198 = vmul.f32 %v188, 0.001953125
    %v199 = vmul.f32 %v197, 0.001953125
    %v200 = vmul.f32 %v198, %v198
    %v201 = vsub.f32 %v199, %v200
    %v202 = vadd.f32 %v201, 1e-05
    %v203 = vrsqrt.pop %v202
    %v204 = vmul.f32 %v203, %v202
    %v205 = vmul.f32 %v204, %v203
    %v206 = vmul.f32 0.5, %v205
    %v207 = vsub.f32 1.5, %v206
    %v208 = vmul.f32 %v203, %v207
    %vm209 = vweird.f32 %v202
    %vm210 = vweird.f32 %v203
    %vm211 = vmor %vm209, %vm210
    %v212 = vsel %vm211, %v203, %v208
    %v213 = vld [vmem:[%s2] sm:$0xff]
    %v214 = vmul.f32 %v212, %v213
    %v215 = vld [vmem:[%s3] sm:$0xff]
    %v216 = vmul.f32 %v198, %v214
    %v217 = vsub.f32 %v215, %v216
    %219 = vset.pattern.permute.xlu0 0
    %220 = vperm.xlu0 %219, %v214
    %v221 = vpop.permute.xlu0 %220
    %v223 = vmul.f32 %v180, %v221
    %v224 = vmul.f32 %v181, %v221
    %v225 = vmul.f32 %v182, %v221
    %v226 = vmul.f32 %v183, %v221
    %228 = vset.pattern.permute.xlu0 0
    %229 = vperm.xlu0 %228, %v217
    %v230 = vpop.permute.xlu0 %229
    %v232 = vadd.f32 %v223, %v230
    %v233 = vadd.f32 %v224, %v230
    %v234 = vadd.f32 %v225, %v230
    %v235 = vadd.f32 %v226, %v230
    %236 = vst [vmem:[#allocation5] sm:$0xff] %v232
    %237 = vst [vmem:[#allocation5 + $0x8] sm:$0xff] %v233
    %238 = vst [vmem:[#allocation5 + $0x10] sm:$0xff] %v234
    %239 = vst [vmem:[#allocation5 + $0x18] sm:$0xff] %v235
    // Predicated region
    $region22: #{tpu_custom_call.1} parent=1 // pred_check
      _
    $region23: #{tpu_custom_call.1} parent=1 // pred_check_branch
      %241 = sbr.rel (0) target = $region25
    $region24: #{tpu_custom_call.1} parent=1 // pred_region
      %243 = vsyncadd [#allocation4], 0
      %s245 = sshll.u32 [#allocation5], 4
      %s246 = int_to_ptr.vmem [resolvable:$true] %s245
      %s247 = sshll.u32 %s4, 4
      %s248 = int_to_ptr.hbm [resolvable:$true] %s247
      %250 = dma.vmem_to_hbm [thread:$0]  %s246, 512, %s248, [#allocation4]
    $region25: #{tpu_custom_call.1} parent=1 // pred_fallthru
      _
    // Predicated region
    $region26: #{tpu_custom_call.1} parent=1 // pred_check
      _
    $region27: #{tpu_custom_call.1} parent=1 // pred_check_branch
      %252 = sbr.rel (0) target = $region29
    $region28: #{tpu_custom_call.1} parent=1 // pred_region
      %254 = dma.done [#allocation4], 512
    $region29: #{tpu_custom_call.1} parent=1 // pred_fallthru
      _
    %255 = vsyncpa [#allocation3], 1
    %256 = vsyncpa [#allocation4], 1

</llo_original>
